<compile_context>
chip_gen: v7x
topology: tpu7x:2x2x1
jax: 0.10.0
libtpu: 0.0.40
codegen_flags: <defaults>
</compile_context>

<pallas_src>
import math
from functools import partial

import jax
import jax.numpy as jnp
from jax import lax
from jax.experimental import pallas as pl
from jax.experimental.pallas import tpu as pltpu

# ----------------------- config (small, consistent with module) -----------------
BATCH = 2
SEQ = 8
HIDDEN = 32                 # config.hidden_size
PRUN_HIDDEN = 16            # config.prun_hidden_size (all_head_size)
NUM_HEADS = 2               # config.num_attention_heads
HEAD_SIZE = PRUN_HIDDEN // NUM_HEADS
PRUN_INTER = 64             # config.prun_intermediate_size
LN_EPS = 1e-12              # config.layer_norm_eps
LANE = 128                  # per-head lane-tile width for padded q/k/v/ctx
NEG_BIG = -1.0e9            # cross-batch blocker in the fused attention mask


def _layer_norm(x, gamma, beta, eps):
    mu = jnp.mean(x, axis=-1, keepdims=True)
    var = jnp.mean((x - mu) ** 2, axis=-1, keepdims=True)
    return (x - mu) * lax.rsqrt(var + eps) * gamma + beta


def _gelu_exact(x):
    # matches torch.nn.functional.gelu (erf form) used by ACT2FN['gelu']
    return 0.5 * x * (1.0 + lax.erf(x * (1.0 / math.sqrt(2.0))))


# ----------------------------------- kernel --------------------------------------
def _costeff_layer_kernel(
    x_ref, mask_ref, wh_ref, wv_ref, vec_ref, out_ref,
    *, rows, num_heads, eps,
):
    f32 = jnp.float32
    nh = num_heads

    x = x_ref[...]                          # [BS, H]
    maskf = mask_ref[...]                   # [BS, BS] block-diag + key mask (finite)
    wh = wh_ref[...]                        # [H+1, 3*nh*128 + PI]  (bias rows folded)
    wv = wv_ref[...]                        # [nh*128 + PI + 1, H]  (wo_pad over w2|b2)
    vec = vec_ref[...]                      # [5, H]: bo | g1 | be1 | g2 | be2
    bo = vec[0:1, :]
    g1 = vec[1:2, :]
    be1 = vec[2:3, :]
    g2 = vec[3:4, :]
    be2 = vec[4:5, :]

    ones = jnp.ones((rows, 1), f32)
    x_aug = jnp.concatenate([x, ones], axis=-1)           # [BS, H+1]

    qkv_w = wh[:, : 3 * nh * LANE]                        # 128-aligned lane slice
    wi = wh[:, 3 * nh * LANE:]                            # [H+1, PI]

    # --- CosteffSelfAttention: fused Q|K|V projection (biases + 1/sqrt(d) folded) ---
    qkv = jnp.dot(x_aug, qkv_w, preferred_element_type=f32)   # [BS, 3*nh*128]

    dn = (((1,), (1,)), ((), ()))           # contract last dims, no explicit transpose
    ctx_parts = []
    for h in range(nh):                     # static, tiny head loop (batch loop fused)
        qh = qkv[:, h * LANE:(h + 1) * LANE]
        kh = qkv[:, (nh + h) * LANE:(nh + h + 1) * LANE]
        vh = qkv[:, (2 * nh + h) * LANE:(2 * nh + h + 1) * LANE]
        scores = lax.dot_general(qh, kh, dn, preferred_element_type=f32)  # [BS, BS]
        logits = scores + maskf
        # No max-subtraction: scale folded into Wq keeps logits O(1) and the mask is
        # finite, so f32 exp cannot overflow and exp(-1e4 / -1e9) flushes to exactly 0.
        # (Assumes every query row has at least one unmasked key, as in BERT.)
        p = jnp.exp(logits)
        denom = jnp.sum(p, axis=-1, keepdims=True)
        probs = p * pl.reciprocal(denom, approx=True)
        ctx_parts.append(jnp.dot(probs, vh, preferred_element_type=f32))  # [BS, 128]
    ctx = jnp.concatenate(ctx_parts, axis=-1)              # [BS, nh*128], aligned concat

    wo = wv[: nh * LANE, :]                                # [nh*128, H] (pad rows zero)
    w2 = wv[nh * LANE:, :]                                 # [PI+1, H]  (b2 row folded)

    # --- CosteffSelfOutput: single wo matmul + bias + residual + LayerNorm ---
    attn = jnp.dot(ctx, wo, preferred_element_type=f32) + bo + x
    attn = _layer_norm(attn, g1, be1, eps)

    # --- CosteffIntermediate: dense (hidden -> prun_intermediate) + exact gelu ---
    attn_aug = jnp.concatenate([attn, ones], axis=-1)
    inter = _gelu_exact(jnp.dot(attn_aug, wi, preferred_element_type=f32))

    # --- CosteffOutput: dense (prun_intermediate -> hidden) + residual + LayerNorm ---
    inter_aug = jnp.concatenate([inter, ones], axis=-1)
    out = jnp.dot(inter_aug, w2, preferred_element_type=f32) + attn
    out = _layer_norm(out, g2, be2, eps)

    out_ref[...] = out.astype(out_ref.dtype)


# ----------------------------------- packing --------------------------------------
def pack_params(p):
    """Pack 18 small parameter arrays into 3 lane/sublane-aligned slabs (3 DMAs).

    w_h : [H+1, 3*NH*128 + PI]   q|k|v per-head 128-lane padded (+bias rows, scale
                                 folded into Wq/bq) followed by wi|bi.
    w_v : [NH*128 + PI + 1, H]   wo padded to per-head 128-row blocks, stacked over
                                 w2|b2.
    vec : [5, H]                 bo, LN1 gamma/beta, LN2 gamma/beta.
    """
    f32 = jnp.float32
    scale = 1.0 / math.sqrt(HEAD_SIZE)

    def head_padded(w, b, s):
        # [H, PH], [1, PH] -> [H+1, NH*128]; head h occupies lanes [h*128, h*128+d)
        out = jnp.zeros((HIDDEN + 1, NUM_HEADS * LANE), f32)
        for h in range(NUM_HEADS):
            c = slice(h * HEAD_SIZE, (h + 1) * HEAD_SIZE)
            out = out.at[:HIDDEN, h * LANE:h * LANE + HEAD_SIZE].set(w[:, c] * s)
            out = out.at[HIDDEN, h * LANE:h * LANE + HEAD_SIZE].set(b[0, c] * s)
        return out

    wq_p = head_padded(p["wq"], p["bq"], scale)        # 1/sqrt(d) folded here
    wk_p = head_padded(p["wk"], p["bk"], 1.0)
    wv_p = head_padded(p["wv"], p["bv"], 1.0)
    wi_a = jnp.concatenate([p["wi"], p["bi"]], axis=0)            # [H+1, PI]
    w_h = jnp.concatenate([wq_p, wk_p, wv_p, wi_a], axis=1)       # [H+1, 3*NH*128+PI]

    wo_p = jnp.zeros((NUM_HEADS * LANE, HIDDEN), f32)
    for h in range(NUM_HEADS):
        wo_p = wo_p.at[h * LANE:h * LANE + HEAD_SIZE, :].set(
            p["wo"][h * HEAD_SIZE:(h + 1) * HEAD_SIZE, :])
    w2_a = jnp.concatenate([p["w2"], p["b2"]], axis=0)            # [PI+1, H]
    w_v = jnp.concatenate([wo_p, w2_a], axis=0)                   # [NH*128+PI+1, H]

    vec = jnp.concatenate([p["bo"], p["g1"], p["be1"], p["g2"], p["be2"]], axis=0)
    return w_h, w_v, vec


def build_fused_mask(mask, B, S):
    """[B,1,S] additive key mask -> [B*S, B*S] block-diagonal additive mask."""
    key_mask = mask.reshape(1, B * S)                       # key column's own batch mask
    bidx = jnp.arange(B * S) // S
    block = jnp.where(bidx[:, None] == bidx[None, :], 0.0, NEG_BIG).astype(jnp.float32)
    return block + key_mask                                 # finite everywhere


# ----------------------------------- wrapper --------------------------------------
def costeff_layer_pallas(x, mask, params):
    """x: [B, S, H] f32; mask: [B, 1, S] additive f32; params: dict of arrays."""
    B, S, H = x.shape
    BS = B * S
    w_h, w_v, vec = pack_params(params)
    x2d = x.reshape(BS, H)
    maskf = build_fused_mask(mask, B, S)

    kernel = partial(_costeff_layer_kernel, rows=BS, num_heads=NUM_HEADS, eps=LN_EPS)

    # Advisory cost hint for XLA scheduling around this latency-bound call.
    flops = (2 * BS * (H + 1) * (3 * NUM_HEADS * LANE)        # fused qkv
             + NUM_HEADS * 4 * BS * BS * LANE                 # scores + ctx per head
             + 2 * BS * (NUM_HEADS * LANE) * H                # wo
             + 2 * BS * (H + 1) * PRUN_INTER                  # wi
             + 2 * BS * (PRUN_INTER + 1) * H)                 # w2
    transcendentals = NUM_HEADS * BS * BS + BS * PRUN_INTER + 2 * BS
    bytes_accessed = 4 * (x2d.size + maskf.size + w_h.size + w_v.size + vec.size + BS * H)

    vmem_spec = pl.BlockSpec(memory_space=pltpu.MemorySpace.VMEM)
    # No grid: the whole problem (~2 KiB activations + ~150 KiB packed params/mask)
    # fits comfortably in VMEM on every generation; the kernel runs exactly once.
    out2d = pl.pallas_call(
        kernel,
        out_shape=jax.ShapeDtypeStruct((BS, H), jnp.float32),
        in_specs=[vmem_spec] * 5,
        out_specs=vmem_spec,
        cost_estimate=pl.CostEstimate(
            flops=flops, transcendentals=transcendentals, bytes_accessed=bytes_accessed),
    )(x2d, maskf, w_h, w_v, vec)
    return out2d.reshape(B, S, H)


# ----------------------------- pure-JAX reference --------------------------------
def costeff_layer_ref(x, mask, p):
    B, S, H = x.shape
    q = x @ p["wq"] + p["bq"]
    k = x @ p["wk"] + p["bk"]
    v = x @ p["wv"] + p["bv"]

    def to_heads(t):
        return t.reshape(B, S, NUM_HEADS, HEAD_SIZE).transpose(0, 2, 1, 3)

    qh, kh, vh = to_heads(q), to_heads(k), to_heads(v)
    scores = jnp.einsum("bhqd,bhkd->bhqk", qh, kh) / math.sqrt(HEAD_SIZE)
    scores = scores + mask[:, None, :, :]           # [B,1,1,S] broadcast
    probs = jax.nn.softmax(scores, axis=-1)
    ctx = jnp.einsum("bhqk,bhkd->bhqd", probs, vh)
    ctx = ctx.transpose(0, 2, 1, 3).reshape(B, S, PRUN_HIDDEN)

    attn = ctx @ p["wo"] + p["bo"]
    attn = _layer_norm(attn + x, p["g1"], p["be1"], LN_EPS)

    inter = _gelu_exact(attn @ p["wi"] + p["bi"])
    out = inter @ p["w2"] + p["b2"]
    out = _layer_norm(out + attn, p["g2"], p["be2"], LN_EPS)
    return out


# ----------------------------- parameter init ------------------------------------
def init_params(key):
    ks = jax.random.split(key, 16)
    s = 0.02

    def nrm(k, shape, scale=s):
        return jax.random.normal(k, shape, jnp.float32) * scale

    return {
        "wq": nrm(ks[0], (HIDDEN, PRUN_HIDDEN)),
        "bq": nrm(ks[1], (1, PRUN_HIDDEN)),
        "wk": nrm(ks[2], (HIDDEN, PRUN_HIDDEN)),
        "bk": nrm(ks[3], (1, PRUN_HIDDEN)),
        "wv": nrm(ks[4], (HIDDEN, PRUN_HIDDEN)),
        "bv": nrm(ks[5], (1, PRUN_HIDDEN)),
        "wo": nrm(ks[6], (PRUN_HIDDEN, HIDDEN)),
        "bo": nrm(ks[7], (1, HIDDEN)),
        "g1": 1.0 + nrm(ks[8], (1, HIDDEN), 0.1),
        "be1": nrm(ks[9], (1, HIDDEN)),
        "wi": nrm(ks[10], (HIDDEN, PRUN_INTER)),
        "bi": nrm(ks[11], (1, PRUN_INTER)),
        "w2": nrm(ks[12], (PRUN_INTER, HIDDEN)),
        "b2": nrm(ks[13], (1, HIDDEN)),
        "g2": 1.0 + nrm(ks[14], (1, HIDDEN), 0.1),
        "be2": nrm(ks[15], (1, HIDDEN)),
    }


if __name__ == "__main__":
    key = jax.random.PRNGKey(0)
    k_x, k_p = jax.random.split(key)

    x = jax.random.normal(k_x, (BATCH, SEQ, HIDDEN), jnp.float32)
    # additive attention mask: batch 0 attends everywhere; batch 1 masks last 2 keys
    mask = jnp.zeros((BATCH, 1, SEQ), jnp.float32)
    mask = mask.at[1, 0, SEQ - 2:].set(-10000.0)

    params = init_params(k_p)

    out = costeff_layer_pallas(x, mask, params)
    out = jax.block_until_ready(out)

    ref = costeff_layer_ref(x, mask, params)
    assert out.shape == (BATCH, SEQ, HIDDEN)
    assert jnp.allclose(out, ref, atol=1e-3, rtol=1e-3), "mismatch vs reference"

    print("KERNEL_OK")
</pallas_src>

<mosaic_0001>
module attributes {stable_mosaic.version = 11 : i64} {
  func.func @_costeff_layer_kernel(%arg0: memref<16x32xf32, #tpu.memory_space<vmem>>, %arg1: memref<16x16xf32, #tpu.memory_space<vmem>>, %arg2: memref<33x832xf32, #tpu.memory_space<vmem>>, %arg3: memref<321x32xf32, #tpu.memory_space<vmem>>, %arg4: memref<5x32xf32, #tpu.memory_space<vmem>>, %arg5: memref<16x32xf32, #tpu.memory_space<vmem>>) attributes {dimension_semantics = [], scalar_prefetch = 0 : i64, scratch_operands = 0 : i64, tpu.core_type = #tpu.core_type<tc>} {
    %c0 = arith.constant 0 : index
    %c0_0 = arith.constant 0 : index
    %0 = vector.load %arg0[%c0, %c0_0] : memref<16x32xf32, #tpu.memory_space<vmem>>, vector<16x32xf32>
    %c0_1 = arith.constant 0 : index
    %c0_2 = arith.constant 0 : index
    %1 = vector.load %arg1[%c0_1, %c0_2] : memref<16x16xf32, #tpu.memory_space<vmem>>, vector<16x16xf32>
    %c0_3 = arith.constant 0 : index
    %c0_4 = arith.constant 0 : index
    %2 = vector.load %arg2[%c0_3, %c0_4] : memref<33x832xf32, #tpu.memory_space<vmem>>, vector<33x832xf32>
    %c0_5 = arith.constant 0 : index
    %c0_6 = arith.constant 0 : index
    %3 = vector.load %arg3[%c0_5, %c0_6] : memref<321x32xf32, #tpu.memory_space<vmem>>, vector<321x32xf32>
    %c0_7 = arith.constant 0 : index
    %c0_8 = arith.constant 0 : index
    %4 = vector.load %arg4[%c0_7, %c0_8] : memref<5x32xf32, #tpu.memory_space<vmem>>, vector<5x32xf32>
    %5 = vector.extract_strided_slice %4 {offsets = [0, 0], sizes = [1, 32], strides = [1, 1]} : vector<5x32xf32> to vector<1x32xf32>
    %6 = vector.extract_strided_slice %4 {offsets = [1, 0], sizes = [1, 32], strides = [1, 1]} : vector<5x32xf32> to vector<1x32xf32>
    %7 = vector.extract_strided_slice %4 {offsets = [2, 0], sizes = [1, 32], strides = [1, 1]} : vector<5x32xf32> to vector<1x32xf32>
    %8 = vector.extract_strided_slice %4 {offsets = [3, 0], sizes = [1, 32], strides = [1, 1]} : vector<5x32xf32> to vector<1x32xf32>
    %9 = vector.extract_strided_slice %4 {offsets = [4, 0], sizes = [1, 32], strides = [1, 1]} : vector<5x32xf32> to vector<1x32xf32>
    %cst = arith.constant 1.000000e+00 : f32
    %10 = vector.broadcast %cst : f32 to vector<16x1xf32>
    %11 = tpu.concatenate %0, %10 in 1 : vector<16x32xf32>, vector<16x1xf32> -> vector<16x33xf32>
    %12 = vector.extract_strided_slice %2 {offsets = [0, 0], sizes = [33, 768], strides = [1, 1]} : vector<33x832xf32> to vector<33x768xf32>
    %13 = vector.extract_strided_slice %2 {offsets = [0, 768], sizes = [33, 64], strides = [1, 1]} : vector<33x832xf32> to vector<33x64xf32>
    %cst_9 = arith.constant dense<0.000000e+00> : vector<16x768xf32>
    %14 = tpu.matmul %11, %12, %cst_9 {dimension_numbers = #tpu.dot_dimension_numbers<[1], [0], [0], [1], [0, 0, 1, 1], [], []>} : vector<16x33xf32>, vector<33x768xf32>, vector<16x768xf32> -> vector<16x768xf32>
    %15 = vector.extract_strided_slice %14 {offsets = [0, 0], sizes = [16, 128], strides = [1, 1]} : vector<16x768xf32> to vector<16x128xf32>
    %16 = vector.extract_strided_slice %14 {offsets = [0, 256], sizes = [16, 128], strides = [1, 1]} : vector<16x768xf32> to vector<16x128xf32>
    %17 = vector.extract_strided_slice %14 {offsets = [0, 512], sizes = [16, 128], strides = [1, 1]} : vector<16x768xf32> to vector<16x128xf32>
    %cst_10 = arith.constant dense<0.000000e+00> : vector<16x16xf32>
    %18 = tpu.matmul %15, %16, %cst_10 {dimension_numbers = #tpu.dot_dimension_numbers<[1], [1], [0], [0], [0, 0, 1, 0], [], []>} : vector<16x128xf32>, vector<16x128xf32>, vector<16x16xf32> -> vector<16x16xf32>
    %19 = arith.addf %18, %1 : vector<16x16xf32>
    %20 = math.exp %19 : vector<16x16xf32>
    %cst_11 = arith.constant dense<0.000000e+00> : vector<16xf32>
    %21 = vector.multi_reduction <add>, %20, %cst_11 [1] : vector<16x16xf32> to vector<16xf32>
    %22 = vector.shape_cast %21 : vector<16xf32> to vector<16x1xf32>
    %23 = tpu.reciprocal %22 {approx = true} : vector<16x1xf32> -> vector<16x1xf32>
    %24 = vector.broadcast %23 : vector<16x1xf32> to vector<16x16xf32>
    %25 = arith.mulf %20, %24 : vector<16x16xf32>
    %cst_12 = arith.constant dense<0.000000e+00> : vector<16x128xf32>
    %26 = tpu.matmul %25, %17, %cst_12 {dimension_numbers = #tpu.dot_dimension_numbers<[1], [0], [0], [1], [0, 0, 1, 1], [], []>} : vector<16x16xf32>, vector<16x128xf32>, vector<16x128xf32> -> vector<16x128xf32>
    %27 = vector.extract_strided_slice %14 {offsets = [0, 128], sizes = [16, 128], strides = [1, 1]} : vector<16x768xf32> to vector<16x128xf32>
    %28 = vector.extract_strided_slice %14 {offsets = [0, 384], sizes = [16, 128], strides = [1, 1]} : vector<16x768xf32> to vector<16x128xf32>
    %29 = vector.extract_strided_slice %14 {offsets = [0, 640], sizes = [16, 128], strides = [1, 1]} : vector<16x768xf32> to vector<16x128xf32>
    %cst_13 = arith.constant dense<0.000000e+00> : vector<16x16xf32>
    %30 = tpu.matmul %27, %28, %cst_13 {dimension_numbers = #tpu.dot_dimension_numbers<[1], [1], [0], [0], [0, 0, 1, 0], [], []>} : vector<16x128xf32>, vector<16x128xf32>, vector<16x16xf32> -> vector<16x16xf32>
    %31 = arith.addf %30, %1 : vector<16x16xf32>
    %32 = math.exp %31 : vector<16x16xf32>
    %cst_14 = arith.constant dense<0.000000e+00> : vector<16xf32>
    %33 = vector.multi_reduction <add>, %32, %cst_14 [1] : vector<16x16xf32> to vector<16xf32>
    %34 = vector.shape_cast %33 : vector<16xf32> to vector<16x1xf32>
    %35 = tpu.reciprocal %34 {approx = true} : vector<16x1xf32> -> vector<16x1xf32>
    %36 = vector.broadcast %35 : vector<16x1xf32> to vector<16x16xf32>
    %37 = arith.mulf %32, %36 : vector<16x16xf32>
    %cst_15 = arith.constant dense<0.000000e+00> : vector<16x128xf32>
    %38 = tpu.matmul %37, %29, %cst_15 {dimension_numbers = #tpu.dot_dimension_numbers<[1], [0], [0], [1], [0, 0, 1, 1], [], []>} : vector<16x16xf32>, vector<16x128xf32>, vector<16x128xf32> -> vector<16x128xf32>
    %39 = tpu.concatenate %26, %38 in 1 : vector<16x128xf32>, vector<16x128xf32> -> vector<16x256xf32>
    %40 = vector.extract_strided_slice %3 {offsets = [0, 0], sizes = [256, 32], strides = [1, 1]} : vector<321x32xf32> to vector<256x32xf32>
    %41 = vector.extract_strided_slice %3 {offsets = [256, 0], sizes = [65, 32], strides = [1, 1]} : vector<321x32xf32> to vector<65x32xf32>
    %cst_16 = arith.constant dense<0.000000e+00> : vector<16x32xf32>
    %42 = tpu.matmul %39, %40, %cst_16 {dimension_numbers = #tpu.dot_dimension_numbers<[1], [0], [0], [1], [0, 0, 1, 1], [], []>} : vector<16x256xf32>, vector<256x32xf32>, vector<16x32xf32> -> vector<16x32xf32>
    %43 = vector.broadcast %5 : vector<1x32xf32> to vector<16x32xf32>
    %44 = arith.addf %42, %43 : vector<16x32xf32>
    %45 = arith.addf %44, %0 : vector<16x32xf32>
    %cst_17 = arith.constant dense<0.000000e+00> : vector<16xf32>
    %46 = vector.multi_reduction <add>, %45, %cst_17 [1] : vector<16x32xf32> to vector<16xf32>
    %47 = vector.shape_cast %46 : vector<16xf32> to vector<16x1xf32>
    %cst_18 = arith.constant 3.200000e+01 : f32
    %48 = vector.broadcast %cst_18 : f32 to vector<16x1xf32>
    %49 = arith.divf %47, %48 : vector<16x1xf32>
    %50 = vector.broadcast %49 : vector<16x1xf32> to vector<16x32xf32>
    %51 = arith.subf %45, %50 : vector<16x32xf32>
    %52 = arith.mulf %51, %51 : vector<16x32xf32>
    %cst_19 = arith.constant dense<0.000000e+00> : vector<16xf32>
    %53 = vector.multi_reduction <add>, %52, %cst_19 [1] : vector<16x32xf32> to vector<16xf32>
    %54 = vector.shape_cast %53 : vector<16xf32> to vector<16x1xf32>
    %cst_20 = arith.constant 3.200000e+01 : f32
    %55 = vector.broadcast %cst_20 : f32 to vector<16x1xf32>
    %56 = arith.divf %54, %55 : vector<16x1xf32>
    %57 = vector.broadcast %49 : vector<16x1xf32> to vector<16x32xf32>
    %58 = arith.subf %45, %57 : vector<16x32xf32>
    %cst_21 = arith.constant 9.99999996E-13 : f32
    %59 = vector.broadcast %cst_21 : f32 to vector<16x1xf32>
    %60 = arith.addf %56, %59 : vector<16x1xf32>
    %61 = math.rsqrt %60 : vector<16x1xf32>
    %62 = vector.broadcast %61 : vector<16x1xf32> to vector<16x32xf32>
    %63 = arith.mulf %58, %62 : vector<16x32xf32>
    %64 = vector.broadcast %6 : vector<1x32xf32> to vector<16x32xf32>
    %65 = arith.mulf %63, %64 : vector<16x32xf32>
    %66 = vector.broadcast %7 : vector<1x32xf32> to vector<16x32xf32>
    %67 = arith.addf %65, %66 : vector<16x32xf32>
    %68 = tpu.concatenate %67, %10 in 1 : vector<16x32xf32>, vector<16x1xf32> -> vector<16x33xf32>
    %cst_22 = arith.constant dense<0.000000e+00> : vector<16x64xf32>
    %69 = tpu.matmul %68, %13, %cst_22 {dimension_numbers = #tpu.dot_dimension_numbers<[1], [0], [0], [1], [0, 0, 1, 1], [], []>} : vector<16x33xf32>, vector<33x64xf32>, vector<16x64xf32> -> vector<16x64xf32>
    %cst_23 = arith.constant 5.000000e-01 : f32
    %70 = vector.broadcast %cst_23 : f32 to vector<16x64xf32>
    %71 = arith.mulf %70, %69 : vector<16x64xf32>
    %cst_24 = arith.constant 0.707106769 : f32
    %72 = vector.broadcast %cst_24 : f32 to vector<16x64xf32>
    %73 = arith.mulf %69, %72 : vector<16x64xf32>
    %74 = math.erf %73 : vector<16x64xf32>
    %cst_25 = arith.constant 1.000000e+00 : f32
    %75 = vector.broadcast %cst_25 : f32 to vector<16x64xf32>
    %76 = arith.addf %75, %74 : vector<16x64xf32>
    %77 = arith.mulf %71, %76 : vector<16x64xf32>
    %78 = tpu.concatenate %77, %10 in 1 : vector<16x64xf32>, vector<16x1xf32> -> vector<16x65xf32>
    %cst_26 = arith.constant dense<0.000000e+00> : vector<16x32xf32>
    %79 = tpu.matmul %78, %41, %cst_26 {dimension_numbers = #tpu.dot_dimension_numbers<[1], [0], [0], [1], [0, 0, 1, 1], [], []>} : vector<16x65xf32>, vector<65x32xf32>, vector<16x32xf32> -> vector<16x32xf32>
    %80 = arith.addf %79, %67 : vector<16x32xf32>
    %cst_27 = arith.constant dense<0.000000e+00> : vector<16xf32>
    %81 = vector.multi_reduction <add>, %80, %cst_27 [1] : vector<16x32xf32> to vector<16xf32>
    %82 = vector.shape_cast %81 : vector<16xf32> to vector<16x1xf32>
    %cst_28 = arith.constant 3.200000e+01 : f32
    %83 = vector.broadcast %cst_28 : f32 to vector<16x1xf32>
    %84 = arith.divf %82, %83 : vector<16x1xf32>
    %85 = vector.broadcast %84 : vector<16x1xf32> to vector<16x32xf32>
    %86 = arith.subf %80, %85 : vector<16x32xf32>
    %87 = arith.mulf %86, %86 : vector<16x32xf32>
    %cst_29 = arith.constant dense<0.000000e+00> : vector<16xf32>
    %88 = vector.multi_reduction <add>, %87, %cst_29 [1] : vector<16x32xf32> to vector<16xf32>
    %89 = vector.shape_cast %88 : vector<16xf32> to vector<16x1xf32>
    %cst_30 = arith.constant 3.200000e+01 : f32
    %90 = vector.broadcast %cst_30 : f32 to vector<16x1xf32>
    %91 = arith.divf %89, %90 : vector<16x1xf32>
    %92 = vector.broadcast %84 : vector<16x1xf32> to vector<16x32xf32>
    %93 = arith.subf %80, %92 : vector<16x32xf32>
    %cst_31 = arith.constant 9.99999996E-13 : f32
    %94 = vector.broadcast %cst_31 : f32 to vector<16x1xf32>
    %95 = arith.addf %91, %94 : vector<16x1xf32>
    %96 = math.rsqrt %95 : vector<16x1xf32>
    %97 = vector.broadcast %96 : vector<16x1xf32> to vector<16x32xf32>
    %98 = arith.mulf %93, %97 : vector<16x32xf32>
    %99 = vector.broadcast %8 : vector<1x32xf32> to vector<16x32xf32>
    %100 = arith.mulf %98, %99 : vector<16x32xf32>
    %101 = vector.broadcast %9 : vector<1x32xf32> to vector<16x32xf32>
    %102 = arith.addf %100, %101 : vector<16x32xf32>
    %c0_32 = arith.constant 0 : index
    %c0_33 = arith.constant 0 : index
    %103 = vector.load %arg5[%c0_32, %c0_33] : memref<16x32xf32, #tpu.memory_space<vmem>>, vector<16x32xf32>
    tpu.vector_store %arg5[%c0_32, %c0_33], %102 {strides = array<i32>} : memref<16x32xf32, #tpu.memory_space<vmem>>, vector<16x32xf32>,
    return
  }
}

</mosaic_0001>

<llo_original>
// kernel: tpu_custom_call.1
$region0: #{tpu_custom_call.1}
  #allocation0 [shape = 'u32[]', space=smem, size = 0x4, offset = 0x4, fixed_abs, tag = 'smem constant byte address 0x4 - core index']
  #allocation1 [shape = 'u32[144,128]{1,0:T(1,128)}', space=vmem, size = 0x12000, scoped, tag = 'internal scratch']
  %s0 = inlined_call_operand.vmem [shape: f32[16,32], index: 0, kind: input, shape index: {}]
  %s1 = inlined_call_operand.vmem [shape: f32[16,16], index: 1, kind: input, shape index: {}]
  %s2 = inlined_call_operand.vmem [shape: f32[33,832], index: 2, kind: input, shape index: {}]
  %s3 = inlined_call_operand.vmem [shape: f32[321,32], index: 3, kind: input, shape index: {}]
  %s4 = inlined_call_operand.vmem [shape: f32[5,32], index: 4, kind: input, shape index: {}]
  %s5 = inlined_call_operand.hbm [shape: f32[16,32], index: 5, kind: output, shape index: {}]
  %s6 = sld [smem:[#allocation0]]
  $region30: #{tpu_custom_call.1} parent=0
    _
  %s8 = ssub.s32 1, %s6
  %s9 = scalar_select 0, %s8, %s6
  $region1: #{tpu_custom_call.1} parent=0
    #allocation2 [shape = 'u8[8192]{0}', space=vmem, size = 0x2000, scoped, tag = 'output window, operand 0, single buffered']
    #allocation3 [shape = 's32[1]{0}', space=sflag, size = 0x4, scoped, tag = 'scoped memory for tpu_custom_call.1']
    %10 = vsyncpa [#allocation3], 0
    // Predicated region
    $region2: #{tpu_custom_call.1} parent=1 // pred_check
      _
    $region3: #{tpu_custom_call.1} parent=1 // pred_check_branch
      %12 = sbr.rel (0) target = $region5
    $region4: #{tpu_custom_call.1} parent=1 // pred_region
      _
    $region5: #{tpu_custom_call.1} parent=1 // pred_fallthru
      _
    // Predicated region
    $region6: #{tpu_custom_call.1} parent=1 // pred_check
      _
    $region7: #{tpu_custom_call.1} parent=1 // pred_check_branch
      %14 = sbr.rel (0) target = $region9
    $region8: #{tpu_custom_call.1} parent=1 // pred_region
      _
    $region9: #{tpu_custom_call.1} parent=1 // pred_fallthru
      _
    // Predicated region
    $region10: #{tpu_custom_call.1} parent=1 // pred_check
      _
    $region11: #{tpu_custom_call.1} parent=1 // pred_check_branch
      %16 = sbr.rel (0) target = $region13
    $region12: #{tpu_custom_call.1} parent=1 // pred_region
      _
    $region13: #{tpu_custom_call.1} parent=1 // pred_fallthru
      _
    // Predicated region
    $region14: #{tpu_custom_call.1} parent=1 // pred_check
      _
    $region15: #{tpu_custom_call.1} parent=1 // pred_check_branch
      %18 = sbr.rel (0) target = $region17
    $region16: #{tpu_custom_call.1} parent=1 // pred_region
      _
    $region17: #{tpu_custom_call.1} parent=1 // pred_fallthru
      _
    // Predicated region
    $region18: #{tpu_custom_call.1} parent=1 // pred_check
      _
    $region19: #{tpu_custom_call.1} parent=1 // pred_check_branch
      %20 = sbr.rel (0) target = $region21
    $region20: #{tpu_custom_call.1} parent=1 // pred_region
      _
    $region21: #{tpu_custom_call.1} parent=1 // pred_fallthru
      _
    %v21 = vld [vmem:[%s0] sm:$0xff]
    %v22 = vld [vmem:[%s0 + $0x8] sm:$0xff]
    %v23 = vld [vmem:[%s1] sm:$0xff]
    %v24 = vld [vmem:[%s1 + $0x8] sm:$0xff]
    %v25 = vld [vmem:[%s2] sm:$0xff]
    %v26 = vld [vmem:[%s2 + $0x8] sm:$0xff]
    %v27 = vld [vmem:[%s2 + $0x10] sm:$0xff]
    %v28 = vld [vmem:[%s2 + $0x18] sm:$0xff]
    %v29 = vld [vmem:[%s2 + $0x20] sm:$0xff]
    %v30 = vld [vmem:[%s2 + $0x28] sm:$0xff]
    %v31 = vld [vmem:[%s2 + $0x30] sm:$0xff]
    %v32 = vld [vmem:[%s2 + $0x38] sm:$0xff]
    %v33 = vld [vmem:[%s2 + $0x40] sm:$0xff]
    %v34 = vld [vmem:[%s2 + $0x48] sm:$0xff]
    %v35 = vld [vmem:[%s2 + $0x50] sm:$0xff]
    %v36 = vld [vmem:[%s2 + $0x58] sm:$0xff]
    %v37 = vld [vmem:[%s2 + $0x60] sm:$0xff]
    %v38 = vld [vmem:[%s2 + $0x68] sm:$0xff]
    %v39 = vld [vmem:[%s2 + $0x70] sm:$0xff]
    %v40 = vld [vmem:[%s2 + $0x78] sm:$0xff]
    %v41 = vld [vmem:[%s2 + $0x80] sm:$0xff]
    %v42 = vld [vmem:[%s2 + $0x88] sm:$0xff]
    %v43 = vld [vmem:[%s2 + $0x90] sm:$0xff]
    %v44 = vld [vmem:[%s2 + $0x98] sm:$0xff]
    %v45 = vld [vmem:[%s2 + $0xa0] sm:$0xff]
    %v46 = vld [vmem:[%s2 + $0xa8] sm:$0xff]
    %v47 = vld [vmem:[%s2 + $0xb0] sm:$0xff]
    %v48 = vld [vmem:[%s2 + $0xb8] sm:$0xff]
    %v49 = vld [vmem:[%s2 + $0xc0] sm:$0xff]
    %v50 = vld [vmem:[%s2 + $0xc8] sm:$0xff]
    %v51 = vld [vmem:[%s2 + $0xd0] sm:$0xff]
    %v52 = vld [vmem:[%s2 + $0xd8] sm:$0xff]
    %v53 = vld [vmem:[%s2 + $0xe0] sm:$0x1]
    %v54 = vld [vmem:[%s2 + $0xe8] sm:$0x1]
    %v55 = vld [vmem:[%s2 + $0xf0] sm:$0x1]
    %v56 = vld [vmem:[%s2 + $0xf8] sm:$0x1]
    %v57 = vld [vmem:[%s2 + $0x100] sm:$0x1]
    %v58 = vld [vmem:[%s2 + $0x108] sm:$0x1]
    %v59 = vld [vmem:[%s2 + $0x110] sm:$0x1]
    %v60 = vld [vmem:[%s3] sm:$0xff]
    %v61 = vld [vmem:[%s3 + $0x8] sm:$0xff]
    %v62 = vld [vmem:[%s3 + $0x10] sm:$0xff]
    %v63 = vld [vmem:[%s3 + $0x18] sm:$0xff]
    %v64 = vld [vmem:[%s3 + $0x20] sm:$0xff]
    %v65 = vld [vmem:[%s3 + $0x28] sm:$0xff]
    %v66 = vld [vmem:[%s3 + $0x30] sm:$0xff]
    %v67 = vld [vmem:[%s3 + $0x38] sm:$0xff]
    %v68 = vld [vmem:[%s3 + $0x40] sm:$0xff]
    %v69 = vld [vmem:[%s3 + $0x48] sm:$0xff]
    %v70 = vld [vmem:[%s3 + $0x50] sm:$0xff]
    %v71 = vld [vmem:[%s3 + $0x58] sm:$0xff]
    %v72 = vld [vmem:[%s3 + $0x60] sm:$0xff]
    %v73 = vld [vmem:[%s3 + $0x68] sm:$0xff]
    %v74 = vld [vmem:[%s3 + $0x70] sm:$0xff]
    %v75 = vld [vmem:[%s3 + $0x78] sm:$0xff]
    %v76 = vld [vmem:[%s3 + $0x80] sm:$0xff]
    %v77 = vld [vmem:[%s3 + $0x88] sm:$0xff]
    %v78 = vld [vmem:[%s3 + $0x90] sm:$0xff]
    %v79 = vld [vmem:[%s3 + $0x98] sm:$0xff]
    %v80 = vld [vmem:[%s3 + $0xa0] sm:$0xff]
    %v81 = vld [vmem:[%s3 + $0xa8] sm:$0xff]
    %v82 = vld [vmem:[%s3 + $0xb0] sm:$0xff]
    %v83 = vld [vmem:[%s3 + $0xb8] sm:$0xff]
    %v84 = vld [vmem:[%s3 + $0xc0] sm:$0xff]
    %v85 = vld [vmem:[%s3 + $0xc8] sm:$0xff]
    %v86 = vld [vmem:[%s3 + $0xd0] sm:$0xff]
    %v87 = vld [vmem:[%s3 + $0xd8] sm:$0xff]
    %v88 = vld [vmem:[%s3 + $0xe0] sm:$0xff]
    %v89 = vld [vmem:[%s3 + $0xe8] sm:$0xff]
    %v90 = vld [vmem:[%s3 + $0xf0] sm:$0xff]
    %v91 = vld [vmem:[%s3 + $0xf8] sm:$0xff]
    %v92 = vld [vmem:[%s3 + $0x100] sm:$0xff]
    %v93 = vld [vmem:[%s3 + $0x108] sm:$0xff]
    %v94 = vld [vmem:[%s3 + $0x110] sm:$0xff]
    %v95 = vld [vmem:[%s3 + $0x118] sm:$0xff]
    %v96 = vld [vmem:[%s3 + $0x120] sm:$0xff]
    %v97 = vld [vmem:[%s3 + $0x128] sm:$0xff]
    %v98 = vld [vmem:[%s3 + $0x130] sm:$0xff]
    %v99 = vld [vmem:[%s3 + $0x138] sm:$0xff]
    %v100 = vld [vmem:[%s3 + $0x140] sm:$0x1]
    %v101 = vld [vmem:[%s4] sm:$0x1f]
    %vm102 = vcmask 261120
    %v103 = vsel %vm102, %v21, 1.0
    %v104 = vsel %vm102, %v22, 1.0
    %vm105 = vcmask 269312
    %v107 = vsel %vm105, %v103, 0
    %v110 = vsel %vm105, %v104, 0
    %vm112 = vcmask 1040384
    %v114 = vsel %vm112, %v53, 0
    %v117 = vsel %vm112, %v54, 0
    %v120 = vsel %vm112, %v55, 0
    %v123 = vsel %vm112, %v56, 0
    %v126 = vsel %vm112, %v57, 0
    %v129 = vsel %vm112, %v58, 0
    %131 = vmatprep.subr.mxu0 %v26
    %132 = vmatpush1.msra.mxu0 %v25
    %133 = vmatprep.subr.mxu0 %v33
    %134 = vmatpush1.msra.mxu0 %v32
    %135 = vmatprep.subr.mxu0 %v40
    %136 = vmatpush1.msra.mxu0 %v39
    %137 = vmatprep.subr.mxu0 %v47
    %138 = vmatpush1.msra.mxu0 %v46
    %139 = vmatprep.subr.mxu0 %v117
    %140 = vmatpush1.msra.mxu0 %v114
    %141 = vmatprep.subr.mxu0 0.0
    %142 = vmatpush1.msra.mxu0 0.0
    %143 = vmatprep.subr.mxu0 0.0
    %144 = vmatpush1.msra.mxu0 0.0
    %145 = vmatprep.subr.mxu0 0.0
    %146 = vmatpush1.msra.mxu0 0.0
    %147 = vmatprep.subr.mxu0 0.0
    %148 = vmatpush1.msra.mxu0 0.0
    %149 = vmatprep.subr.mxu0 0.0
    %150 = vmatpush1.msra.mxu0 0.0
    %151 = vmatprep.subr.mxu0 0.0
    %152 = vmatpush1.msra.mxu0 0.0
    %153 = vmatprep.subr.mxu0 0.0
    %154 = vmatpush1.msra.mxu0 0.0
    %155 = vmatprep.subr.mxu0 0.0
    %156 = vmatpush1.msra.mxu0 0.0
    %157 = vmatprep.subr.mxu0 0.0
    %158 = vmatpush1.msra.mxu0 0.0
    %159 = vmatprep.subr.mxu0 0.0
    %160 = vmatpush1.msra.mxu0 0.0
    %161 = vmatprep.subr.mxu0 0.0
    %162 = vmatpush1.msra.mxu0 0.0
    %163 = vmatprep.subr.mxu0 0.0
    %164 = vmatpush1.msra.mxu0 0.0
    %165 = vmatprep.subr.mxu0 0.0
    %166 = vmatpush1.msra.mxu0 0.0
    %167 = vmatprep.subr.mxu0 0.0
    %168 = vmatpush1.msra.mxu0 0.0
    %169 = vmatprep.subr.mxu0 0.0
    %170 = vmatpush1.msra.mxu0 0.0
    %171 = vmatprep.subr.mxu0 0.0
    %172 = vmatpush1.msra.mxu0 0.0
    %173 = vmatprep.subr.mxu0 0.0
    %174 = vmatpush1.msra.mxu0 0.0
    %175 = vmatprep.subr.mxu0 0.0
    %176 = vmatpush1.msra.mxu0 0.0
    %177 = vmatprep.subr.mxu0 0.0
    %178 = vmatpush1.msra.mxu0 0.0
    %179 = vmatprep.subr.mxu0 0.0
    %180 = vmatpush1.msra.mxu0 0.0
    %181 = vmatprep.subr.mxu0 0.0
    %182 = vmatpush1.msra.mxu0 0.0
    %183 = vmatprep.subr.mxu0 0.0
    %184 = vmatpush1.msra.mxu0 0.0
    %185 = vmatprep.subr.mxu0 0.0
    %186 = vmatpush1.msra.mxu0 0.0
    %187 = vmatprep.subr.mxu0 0.0
    %188 = vmatpush1.msra.mxu0 0.0
    %189 = vmatprep.subr.mxu0 0.0
    %190 = vmatpush1.msra.mxu0 0.0
    %191 = vmatprep.subr.mxu0 0.0
    %192 = vmatpush1.msra.mxu0 0.0
    %193 = vmatprep.subr.mxu0 0.0
    %194 = vmatpush1.msra.mxu0 0.0
    %195 = vmatprep.mubr.f32.mxu0 0.0
    %196 = vmatmul.mubr.f32.gmra.mrb[0].mxu0 %v107
    %v197 = vpop.f32.mrb[0].mxu0
    %v198 = vadd.f32 0.0, %v197
    %v199 = vpop.f32.mrb[0].mxu0
    %v200 = vadd.f32 0.0, %v199
    %201 = vmatprep.mubr.f32.mxu0 0.0
    %202 = vmatmul.mubr.f32.gmra.mrb[0].mxu0 %v110
    %v203 = vpop.f32.mrb[0].mxu0
    %v204 = vadd.f32 0.0, %v203
    %v205 = vpop.f32.mrb[0].mxu0
    %v206 = vadd.f32 0.0, %v205
    %207 = vdwg.mxu0
    %208 = vmatprep.subr.mxu0 %v28
    %209 = vmatpush1.msra.mxu0 %v27
    %210 = vmatprep.subr.mxu0 %v35
    %211 = vmatpush1.msra.mxu0 %v34
    %212 = vmatprep.subr.mxu0 %v42
    %213 = vmatpush1.msra.mxu0 %v41
    %214 = vmatprep.subr.mxu0 %v49
    %215 = vmatpush1.msra.mxu0 %v48
    %216 = vmatprep.subr.mxu0 %v123
    %217 = vmatpush1.msra.mxu0 %v120
    %218 = vmatprep.subr.mxu0 0.0
    %219 = vmatpush1.msra.mxu0 0.0
    %220 = vmatprep.subr.mxu0 0.0
    %221 = vmatpush1.msra.mxu0 0.0
    %222 = vmatprep.subr.mxu0 0.0
    %223 = vmatpush1.msra.mxu0 0.0
    %224 = vmatprep.subr.mxu0 0.0
    %225 = vmatpush1.msra.mxu0 0.0
    %226 = vmatprep.subr.mxu0 0.0
    %227 = vmatpush1.msra.mxu0 0.0
    %228 = vmatprep.subr.mxu0 0.0
    %229 = vmatpush1.msra.mxu0 0.0
    %230 = vmatprep.subr.mxu0 0.0
    %231 = vmatpush1.msra.mxu0 0.0
    %232 = vmatprep.subr.mxu0 0.0
    %233 = vmatpush1.msra.mxu0 0.0
    %234 = vmatprep.subr.mxu0 0.0
    %235 = vmatpush1.msra.mxu0 0.0
    %236 = vmatprep.subr.mxu0 0.0
    %237 = vmatpush1.msra.mxu0 0.0
    %238 = vmatprep.subr.mxu0 0.0
    %239 = vmatpush1.msra.mxu0 0.0
    %240 = vmatprep.subr.mxu0 0.0
    %241 = vmatpush1.msra.mxu0 0.0
    %242 = vmatprep.subr.mxu0 0.0
    %243 = vmatpush1.msra.mxu0 0.0
    %244 = vmatprep.subr.mxu0 0.0
    %245 = vmatpush1.msra.mxu0 0.0
    %246 = vmatprep.subr.mxu0 0.0
    %247 = vmatpush1.msra.mxu0 0.0
    %248 = vmatprep.subr.mxu0 0.0
    %249 = vmatpush1.msra.mxu0 0.0
    %250 = vmatprep.subr.mxu0 0.0
    %251 = vmatpush1.msra.mxu0 0.0
    %252 = vmatprep.subr.mxu0 0.0
    %253 = vmatpush1.msra.mxu0 0.0
    %254 = vmatprep.subr.mxu0 0.0
    %255 = vmatpush1.msra.mxu0 0.0
    %256 = vmatprep.subr.mxu0 0.0
    %257 = vmatpush1.msra.mxu0 0.0
    %258 = vmatprep.subr.mxu0 0.0
    %259 = vmatpush1.msra.mxu0 0.0
    %260 = vmatprep.subr.mxu0 0.0
    %261 = vmatpush1.msra.mxu0 0.0
    %262 = vmatprep.subr.mxu0 0.0
    %263 = vmatpush1.msra.mxu0 0.0
    %264 = vmatprep.subr.mxu0 0.0
    %265 = vmatpush1.msra.mxu0 0.0
    %266 = vmatprep.subr.mxu0 0.0
    %267 = vmatpush1.msra.mxu0 0.0
    %268 = vmatprep.subr.mxu0 0.0
    %269 = vmatpush1.msra.mxu0 0.0
    %270 = vmatprep.subr.mxu0 0.0
    %271 = vmatpush1.msra.mxu0 0.0
    %272 = vmatprep.mubr.f32.mxu0 0.0
    %273 = vmatmul.mubr.f32.gmra.mrb[0].mxu0 %v107
    %v274 = vpop.f32.mrb[0].mxu0
    %v275 = vadd.f32 0.0, %v274
    %v276 = vpop.f32.mrb[0].mxu0
    %v277 = vadd.f32 0.0, %v276
    %278 = vmatprep.mubr.f32.mxu0 0.0
    %279 = vmatmul.mubr.f32.gmra.mrb[0].mxu0 %v110
    %v280 = vpop.f32.mrb[0].mxu0
    %v281 = vadd.f32 0.0, %v280
    %v282 = vpop.f32.mrb[0].mxu0
    %v283 = vadd.f32 0.0, %v282
    %284 = vdwg.mxu0
    %285 = vmatprep.subr.mxu0 %v30
    %286 = vmatpush1.msra.mxu0 %v29
    %287 = vmatprep.subr.mxu0 %v37
    %288 = vmatpush1.msra.mxu0 %v36
    %289 = vmatprep.subr.mxu0 %v44
    %290 = vmatpush1.msra.mxu0 %v43
    %291 = vmatprep.subr.mxu0 %v51
    %292 = vmatpush1.msra.mxu0 %v50
    %293 = vmatprep.subr.mxu0 %v129
    %294 = vmatpush1.msra.mxu0 %v126
    %295 = vmatprep.subr.mxu0 0.0
    %296 = vmatpush1.msra.mxu0 0.0
    %297 = vmatprep.subr.mxu0 0.0
    %298 = vmatpush1.msra.mxu0 0.0
    %299 = vmatprep.subr.mxu0 0.0
    %300 = vmatpush1.msra.mxu0 0.0
    %301 = vmatprep.subr.mxu0 0.0
    %302 = vmatpush1.msra.mxu0 0.0
    %303 = vmatprep.subr.mxu0 0.0
    %304 = vmatpush1.msra.mxu0 0.0
    %305 = vmatprep.subr.mxu0 0.0
    %306 = vmatpush1.msra.mxu0 0.0
    %307 = vmatprep.subr.mxu0 0.0
    %308 = vmatpush1.msra.mxu0 0.0
    %309 = vmatprep.subr.mxu0 0.0
    %310 = vmatpush1.msra.mxu0 0.0
    %311 = vmatprep.subr.mxu0 0.0
    %312 = vmatpush1.msra.mxu0 0.0
    %313 = vmatprep.subr.mxu0 0.0
    %314 = vmatpush1.msra.mxu0 0.0
    %315 = vmatprep.subr.mxu0 0.0
    %316 = vmatpush1.msra.mxu0 0.0
    %317 = vmatprep.subr.mxu0 0.0
    %318 = vmatpush1.msra.mxu0 0.0
    %319 = vmatprep.subr.mxu0 0.0
    %320 = vmatpush1.msra.mxu0 0.0
    %321 = vmatprep.subr.mxu0 0.0
    %322 = vmatpush1.msra.mxu0 0.0
    %323 = vmatprep.subr.mxu0 0.0
    %324 = vmatpush1.msra.mxu0 0.0
    %325 = vmatprep.subr.mxu0 0.0
    %326 = vmatpush1.msra.mxu0 0.0
    %327 = vmatprep.subr.mxu0 0.0
    %328 = vmatpush1.msra.mxu0 0.0
    %329 = vmatprep.subr.mxu0 0.0
    %330 = vmatpush1.msra.mxu0 0.0
    %331 = vmatprep.subr.mxu0 0.0
    %332 = vmatpush1.msra.mxu0 0.0
    %333 = vmatprep.subr.mxu0 0.0
    %334 = vmatpush1.msra.mxu0 0.0
    %335 = vmatprep.subr.mxu0 0.0
    %336 = vmatpush1.msra.mxu0 0.0
    %337 = vmatprep.subr.mxu0 0.0
    %338 = vmatpush1.msra.mxu0 0.0
    %339 = vmatprep.subr.mxu0 0.0
    %340 = vmatpush1.msra.mxu0 0.0
    %341 = vmatprep.subr.mxu0 0.0
    %342 = vmatpush1.msra.mxu0 0.0
    %343 = vmatprep.subr.mxu0 0.0
    %344 = vmatpush1.msra.mxu0 0.0
    %345 = vmatprep.subr.mxu0 0.0
    %346 = vmatpush1.msra.mxu0 0.0
    %347 = vmatprep.subr.mxu0 0.0
    %348 = vmatpush1.msra.mxu0 0.0
    %349 = vmatprep.mubr.f32.mxu0 0.0
    %350 = vmatmul.mubr.f32.gmra.mrb[0].mxu0 %v107
    %v351 = vpop.f32.mrb[0].mxu0
    %v352 = vadd.f32 0.0, %v351
    %v353 = vpop.f32.mrb[0].mxu0
    %v354 = vadd.f32 0.0, %v353
    %355 = vmatprep.mubr.f32.mxu0 0.0
    %356 = vmatmul.mubr.f32.gmra.mrb[0].mxu0 %v110
    %v357 = vpop.f32.mrb[0].mxu0
    %v358 = vadd.f32 0.0, %v357
    %v359 = vpop.f32.mrb[0].mxu0
    %v360 = vadd.f32 0.0, %v359
    %361 = vdwg.mxu0
    %362 = vmatprep.subr.mxu0 0.0
    %363 = vmatpush1.xpose.msra.mxu0 %v275
    %364 = vmatprep.subr.mxu0 0.0
    %365 = vmatpush1.xpose.msra.mxu0 %v281
    %366 = vmatprep.subr.mxu0 0.0
    %367 = vmatpush1.xpose.msra.mxu0 0.0
    %368 = vmatprep.subr.mxu0 0.0
    %369 = vmatpush1.xpose.msra.mxu0 0.0
    %370 = vmatprep.subr.mxu0 0.0
    %371 = vmatpush1.xpose.msra.mxu0 0.0
    %372 = vmatprep.subr.mxu0 0.0
    %373 = vmatpush1.xpose.msra.mxu0 0.0
    %374 = vmatprep.subr.mxu0 0.0
    %375 = vmatpush1.xpose.msra.mxu0 0.0
    %376 = vmatprep.subr.mxu0 0.0
    %377 = vmatpush1.xpose.msra.mxu0 0.0
    %378 = vmatprep.subr.mxu0 0.0
    %379 = vmatpush1.xpose.msra.mxu0 0.0
    %380 = vmatprep.subr.mxu0 0.0
    %381 = vmatpush1.xpose.msra.mxu0 0.0
    %382 = vmatprep.subr.mxu0 0.0
    %383 = vmatpush1.xpose.msra.mxu0 0.0
    %384 = vmatprep.subr.mxu0 0.0
    %385 = vmatpush1.xpose.msra.mxu0 0.0
    %386 = vmatprep.subr.mxu0 0.0
    %387 = vmatpush1.xpose.msra.mxu0 0.0
    %388 = vmatprep.subr.mxu0 0.0
    %389 = vmatpush1.xpose.msra.mxu0 0.0
    %390 = vmatprep.subr.mxu0 0.0
    %391 = vmatpush1.xpose.msra.mxu0 0.0
    %392 = vmatprep.subr.mxu0 0.0
    %393 = vmatpush1.xpose.msra.mxu0 0.0
    %394 = vmatprep.subr.mxu0 0.0
    %395 = vmatpush1.xpose.msra.mxu0 0.0
    %396 = vmatprep.subr.mxu0 0.0
    %397 = vmatpush1.xpose.msra.mxu0 0.0
    %398 = vmatprep.subr.mxu0 0.0
    %399 = vmatpush1.xpose.msra.mxu0 0.0
    %400 = vmatprep.subr.mxu0 0.0
    %401 = vmatpush1.xpose.msra.mxu0 0.0
    %402 = vmatprep.subr.mxu0 0.0
    %403 = vmatpush1.xpose.msra.mxu0 0.0
    %404 = vmatprep.subr.mxu0 0.0
    %405 = vmatpush1.xpose.msra.mxu0 0.0
    %406 = vmatprep.subr.mxu0 0.0
    %407 = vmatpush1.xpose.msra.mxu0 0.0
    %408 = vmatprep.subr.mxu0 0.0
    %409 = vmatpush1.xpose.msra.mxu0 0.0
    %410 = vmatprep.subr.mxu0 0.0
    %411 = vmatpush1.xpose.msra.mxu0 0.0
    %412 = vmatprep.subr.mxu0 0.0
    %413 = vmatpush1.xpose.msra.mxu0 0.0
    %414 = vmatprep.subr.mxu0 0.0
    %415 = vmatpush1.xpose.msra.mxu0 0.0
    %416 = vmatprep.subr.mxu0 0.0
    %417 = vmatpush1.xpose.msra.mxu0 0.0
    %418 = vmatprep.subr.mxu0 0.0
    %419 = vmatpush1.xpose.msra.mxu0 0.0
    %420 = vmatprep.subr.mxu0 0.0
    %421 = vmatpush1.xpose.msra.mxu0 0.0
    %422 = vmatprep.subr.mxu0 0.0
    %423 = vmatpush1.xpose.msra.mxu0 0.0
    %424 = vmatprep.subr.mxu0 0.0
    %425 = vmatpush1.xpose.msra.mxu0 0.0
    %426 = vmatprep.mubr.f32.mxu0 0.0
    %427 = vmatmul.mubr.f32.gmra.mrb[0].mxu0 %v198
    %v428 = vpop.f32.mrb[0].mxu0
    %v429 = vadd.f32 %v23, %v428
    %v430 = vpop.f32.mrb[0].mxu0
    %431 = vmatprep.mubr.f32.mxu0 0.0
    %432 = vmatmul.mubr.f32.gmra.mrb[0].mxu0 %v204
    %v433 = vpop.f32.mrb[0].mxu0
    %v434 = vadd.f32 %v24, %v433
    %v435 = vpop.f32.mrb[0].mxu0
    %436 = vdwg.mxu0
    %v437 = vmul.f32 %v429, 1.442695
    %v438 = vpow.pop %v437
    %v439 = vmul.f32 %v434, 1.442695
    %v440 = vpow.pop %v439
    %vm441 = vcmask 130048
    %v442 = vsel %vm441, %v438, 0.0
    %443 = vadd.xlane.f32.xlu0 %v442
    %v444 = vpop.xlane.xlu0 %443
    %v445 = vsel %vm441, %v440, 0.0
    %446 = vadd.xlane.f32.xlu0 %v445
    %v447 = vpop.xlane.xlu0 %446
    %v448 = vrcp.pop %v444
    %v449 = vrcp.pop %v447
    %v450 = vmul.f32 %v438, %v448
    %v451 = vmul.f32 %v440, %v449
    %v453 = vsel %vm441, %v450, 0
    %v456 = vsel %vm441, %v451, 0
    %458 = vmatprep.subr.mxu0 0.0
    %459 = vmatpush1.msra.mxu0 %v352
    %460 = vmatprep.subr.mxu0 0.0
    %461 = vmatpush1.msra.mxu0 %v358
    %462 = vmatprep.subr.mxu0 0.0
    %463 = vmatpush1.msra.mxu0 0.0
    %464 = vmatprep.subr.mxu0 0.0
    %465 = vmatpush1.msra.mxu0 0.0
    %466 = vmatprep.subr.mxu0 0.0
    %467 = vmatpush1.msra.mxu0 0.0
    %468 = vmatprep.subr.mxu0 0.0
    %469 = vmatpush1.msra.mxu0 0.0
    %470 = vmatprep.subr.mxu0 0.0
    %471 = vmatpush1.msra.mxu0 0.0
    %472 = vmatprep.subr.mxu0 0.0
    %473 = vmatpush1.msra.mxu0 0.0
    %474 = vmatprep.subr.mxu0 0.0
    %475 = vmatpush1.msra.mxu0 0.0
    %476 = vmatprep.subr.mxu0 0.0
    %477 = vmatpush1.msra.mxu0 0.0
    %478 = vmatprep.subr.mxu0 0.0
    %479 = vmatpush1.msra.mxu0 0.0
    %480 = vmatprep.subr.mxu0 0.0
    %481 = vmatpush1.msra.mxu0 0.0
    %482 = vmatprep.subr.mxu0 0.0
    %483 = vmatpush1.msra.mxu0 0.0
    %484 = vmatprep.subr.mxu0 0.0
    %485 = vmatpush1.msra.mxu0 0.0
    %486 = vmatprep.subr.mxu0 0.0
    %487 = vmatpush1.msra.mxu0 0.0
    %488 = vmatprep.subr.mxu0 0.0
    %489 = vmatpush1.msra.mxu0 0.0
    %490 = vmatprep.subr.mxu0 0.0
    %491 = vmatpush1.msra.mxu0 0.0
    %492 = vmatprep.subr.mxu0 0.0
    %493 = vmatpush1.msra.mxu0 0.0
    %494 = vmatprep.subr.mxu0 0.0
    %495 = vmatpush1.msra.mxu0 0.0
    %496 = vmatprep.subr.mxu0 0.0
    %497 = vmatpush1.msra.mxu0 0.0
    %498 = vmatprep.subr.mxu0 0.0
    %499 = vmatpush1.msra.mxu0 0.0
    %500 = vmatprep.subr.mxu0 0.0
    %501 = vmatpush1.msra.mxu0 0.0
    %502 = vmatprep.subr.mxu0 0.0
    %503 = vmatpush1.msra.mxu0 0.0
    %504 = vmatprep.subr.mxu0 0.0
    %505 = vmatpush1.msra.mxu0 0.0
    %506 = vmatprep.subr.mxu0 0.0
    %507 = vmatpush1.msra.mxu0 0.0
    %508 = vmatprep.subr.mxu0 0.0
    %509 = vmatpush1.msra.mxu0 0.0
    %510 = vmatprep.subr.mxu0 0.0
    %511 = vmatpush1.msra.mxu0 0.0
    %512 = vmatprep.subr.mxu0 0.0
    %513 = vmatpush1.msra.mxu0 0.0
    %514 = vmatprep.subr.mxu0 0.0
    %515 = vmatpush1.msra.mxu0 0.0
    %516 = vmatprep.subr.mxu0 0.0
    %517 = vmatpush1.msra.mxu0 0.0
    %518 = vmatprep.subr.mxu0 0.0
    %519 = vmatpush1.msra.mxu0 0.0
    %520 = vmatprep.subr.mxu0 0.0
    %521 = vmatpush1.msra.mxu0 0.0
    %522 = vmatprep.mubr.f32.mxu0 0.0
    %523 = vmatmul.mubr.f32.gmra.mrb[0].mxu0 %v453
    %v524 = vpop.f32.mrb[0].mxu0
    %v525 = vadd.f32 0.0, %v524
    %v526 = vpop.f32.mrb[0].mxu0
    %527 = vmatprep.mubr.f32.mxu0 0.0
    %528 = vmatmul.mubr.f32.gmra.mrb[0].mxu0 %v456
    %v529 = vpop.f32.mrb[0].mxu0
    %v530 = vadd.f32 0.0, %v529
    %v531 = vpop.f32.mrb[0].mxu0
    %532 = vdwg.mxu0
    %533 = vmatprep.subr.mxu0 0.0
    %534 = vmatpush1.xpose.msra.mxu0 %v277
    %535 = vmatprep.subr.mxu0 0.0
    %536 = vmatpush1.xpose.msra.mxu0 %v283
    %537 = vmatprep.subr.mxu0 0.0
    %538 = vmatpush1.xpose.msra.mxu0 0.0
    %539 = vmatprep.subr.mxu0 0.0
    %540 = vmatpush1.xpose.msra.mxu0 0.0
    %541 = vmatprep.subr.mxu0 0.0
    %542 = vmatpush1.xpose.msra.mxu0 0.0
    %543 = vmatprep.subr.mxu0 0.0
    %544 = vmatpush1.xpose.msra.mxu0 0.0
    %545 = vmatprep.subr.mxu0 0.0
    %546 = vmatpush1.xpose.msra.mxu0 0.0
    %547 = vmatprep.subr.mxu0 0.0
    %548 = vmatpush1.xpose.msra.mxu0 0.0
    %549 = vmatprep.subr.mxu0 0.0
    %550 = vmatpush1.xpose.msra.mxu0 0.0
    %551 = vmatprep.subr.mxu0 0.0
    %552 = vmatpush1.xpose.msra.mxu0 0.0
    %553 = vmatprep.subr.mxu0 0.0
    %554 = vmatpush1.xpose.msra.mxu0 0.0
    %555 = vmatprep.subr.mxu0 0.0
    %556 = vmatpush1.xpose.msra.mxu0 0.0
    %557 = vmatprep.subr.mxu0 0.0
    %558 = vmatpush1.xpose.msra.mxu0 0.0
    %559 = vmatprep.subr.mxu0 0.0
    %560 = vmatpush1.xpose.msra.mxu0 0.0
    %561 = vmatprep.subr.mxu0 0.0
    %562 = vmatpush1.xpose.msra.mxu0 0.0
    %563 = vmatprep.subr.mxu0 0.0
    %564 = vmatpush1.xpose.msra.mxu0 0.0
    %565 = vmatprep.subr.mxu0 0.0
    %566 = vmatpush1.xpose.msra.mxu0 0.0
    %567 = vmatprep.subr.mxu0 0.0
    %568 = vmatpush1.xpose.msra.mxu0 0.0
    %569 = vmatprep.subr.mxu0 0.0
    %570 = vmatpush1.xpose.msra.mxu0 0.0
    %571 = vmatprep.subr.mxu0 0.0
    %572 = vmatpush1.xpose.msra.mxu0 0.0
    %573 = vmatprep.subr.mxu0 0.0
    %574 = vmatpush1.xpose.msra.mxu0 0.0
    %575 = vmatprep.subr.mxu0 0.0
    %576 = vmatpush1.xpose.msra.mxu0 0.0
    %577 = vmatprep.subr.mxu0 0.0
    %578 = vmatpush1.xpose.msra.mxu0 0.0
    %579 = vmatprep.subr.mxu0 0.0
    %580 = vmatpush1.xpose.msra.mxu0 0.0
    %581 = vmatprep.subr.mxu0 0.0
    %582 = vmatpush1.xpose.msra.mxu0 0.0
    %583 = vmatprep.subr.mxu0 0.0
    %584 = vmatpush1.xpose.msra.mxu0 0.0
    %585 = vmatprep.subr.mxu0 0.0
    %586 = vmatpush1.xpose.msra.mxu0 0.0
    %587 = vmatprep.subr.mxu0 0.0
    %588 = vmatpush1.xpose.msra.mxu0 0.0
    %589 = vmatprep.subr.mxu0 0.0
    %590 = vmatpush1.xpose.msra.mxu0 0.0
    %591 = vmatprep.subr.mxu0 0.0
    %592 = vmatpush1.xpose.msra.mxu0 0.0
    %593 = vmatprep.subr.mxu0 0.0
    %594 = vmatpush1.xpose.msra.mxu0 0.0
    %595 = vmatprep.subr.mxu0 0.0
    %596 = vmatpush1.xpose.msra.mxu0 0.0
    %597 = vmatprep.mubr.f32.mxu0 0.0
    %598 = vmatmul.mubr.f32.gmra.mrb[0].mxu0 %v200
    %v599 = vpop.f32.mrb[0].mxu0
    %v600 = vadd.f32 %v23, %v599
    %v601 = vpop.f32.mrb[0].mxu0
    %602 = vmatprep.mubr.f32.mxu0 0.0
    %603 = vmatmul.mubr.f32.gmra.mrb[0].mxu0 %v206
    %v604 = vpop.f32.mrb[0].mxu0
    %v605 = vadd.f32 %v24, %v604
    %v606 = vpop.f32.mrb[0].mxu0
    %607 = vdwg.mxu0
    %v608 = vmul.f32 %v600, 1.442695
    %v609 = vpow.pop %v608
    %v610 = vmul.f32 %v605, 1.442695
    %v611 = vpow.pop %v610
    %v612 = vsel %vm441, %v609, 0.0
    %613 = vadd.xlane.f32.xlu0 %v612
    %v614 = vpop.xlane.xlu0 %613
    %v615 = vsel %vm441, %v611, 0.0
    %616 = vadd.xlane.f32.xlu0 %v615
    %v617 = vpop.xlane.xlu0 %616
    %v618 = vrcp.pop %v614
    %v619 = vrcp.pop %v617
    %v620 = vmul.f32 %v609, %v618
    %v621 = vmul.f32 %v611, %v619
    %v623 = vsel %vm441, %v620, 0
    %v626 = vsel %vm441, %v621, 0
    %628 = vmatprep.subr.mxu0 0.0
    %629 = vmatpush1.msra.mxu0 %v354
    %630 = vmatprep.subr.mxu0 0.0
    %631 = vmatpush1.msra.mxu0 %v360
    %632 = vmatprep.subr.mxu0 0.0
    %633 = vmatpush1.msra.mxu0 0.0
    %634 = vmatprep.subr.mxu0 0.0
    %635 = vmatpush1.msra.mxu0 0.0
    %636 = vmatprep.subr.mxu0 0.0
    %637 = vmatpush1.msra.mxu0 0.0
    %638 = vmatprep.subr.mxu0 0.0
    %639 = vmatpush1.msra.mxu0 0.0
    %640 = vmatprep.subr.mxu0 0.0
    %641 = vmatpush1.msra.mxu0 0.0
    %642 = vmatprep.subr.mxu0 0.0
    %643 = vmatpush1.msra.mxu0 0.0
    %644 = vmatprep.subr.mxu0 0.0
    %645 = vmatpush1.msra.mxu0 0.0
    %646 = vmatprep.subr.mxu0 0.0
    %647 = vmatpush1.msra.mxu0 0.0
    %648 = vmatprep.subr.mxu0 0.0
    %649 = vmatpush1.msra.mxu0 0.0
    %650 = vmatprep.subr.mxu0 0.0
    %651 = vmatpush1.msra.mxu0 0.0
    %652 = vmatprep.subr.mxu0 0.0
    %653 = vmatpush1.msra.mxu0 0.0
    %654 = vmatprep.subr.mxu0 0.0
    %655 = vmatpush1.msra.mxu0 0.0
    %656 = vmatprep.subr.mxu0 0.0
    %657 = vmatpush1.msra.mxu0 0.0
    %658 = vmatprep.subr.mxu0 0.0
    %659 = vmatpush1.msra.mxu0 0.0
    %660 = vmatprep.subr.mxu0 0.0
    %661 = vmatpush1.msra.mxu0 0.0
    %662 = vmatprep.subr.mxu0 0.0
    %663 = vmatpush1.msra.mxu0 0.0
    %664 = vmatprep.subr.mxu0 0.0
    %665 = vmatpush1.msra.mxu0 0.0
    %666 = vmatprep.subr.mxu0 0.0
    %667 = vmatpush1.msra.mxu0 0.0
    %668 = vmatprep.subr.mxu0 0.0
    %669 = vmatpush1.msra.mxu0 0.0
    %670 = vmatprep.subr.mxu0 0.0
    %671 = vmatpush1.msra.mxu0 0.0
    %672 = vmatprep.subr.mxu0 0.0
    %673 = vmatpush1.msra.mxu0 0.0
    %674 = vmatprep.subr.mxu0 0.0
    %675 = vmatpush1.msra.mxu0 0.0
    %676 = vmatprep.subr.mxu0 0.0
    %677 = vmatpush1.msra.mxu0 0.0
    %678 = vmatprep.subr.mxu0 0.0
    %679 = vmatpush1.msra.mxu0 0.0
    %680 = vmatprep.subr.mxu0 0.0
    %681 = vmatpush1.msra.mxu0 0.0
    %682 = vmatprep.subr.mxu0 0.0
    %683 = vmatpush1.msra.mxu0 0.0
    %684 = vmatprep.subr.mxu0 0.0
    %685 = vmatpush1.msra.mxu0 0.0
    %686 = vmatprep.subr.mxu0 0.0
    %687 = vmatpush1.msra.mxu0 0.0
    %688 = vmatprep.subr.mxu0 0.0
    %689 = vmatpush1.msra.mxu0 0.0
    %690 = vmatprep.subr.mxu0 0.0
    %691 = vmatpush1.msra.mxu0 0.0
    %692 = vmatprep.mubr.f32.mxu0 0.0
    %693 = vmatmul.mubr.f32.gmra.mrb[0].mxu0 %v623
    %v694 = vpop.f32.mrb[0].mxu0
    %v695 = vadd.f32 0.0, %v694
    %v696 = vpop.f32.mrb[0].mxu0
    %697 = vmatprep.mubr.f32.mxu0 0.0
    %698 = vmatmul.mubr.f32.gmra.mrb[0].mxu0 %v626
    %v699 = vpop.f32.mrb[0].mxu0
    %v700 = vadd.f32 0.0, %v699
    %v701 = vpop.f32.mrb[0].mxu0
    %702 = vdwg.mxu0
    %v703 = vlaneseq
    %v704 = vshrl.u32 %v703, 7
    %v705 = vsub.s32 0, %v704
    %v706 = vrot.slane %v101, %v705
    %707 = vmatprep.subr.mxu0 0.0
    %708 = vmatpush1.msra.mxu0 %v60
    %709 = vmatprep.subr.mxu0 0.0
    %710 = vmatpush1.msra.mxu0 %v61
    %711 = vmatprep.subr.mxu0 0.0
    %712 = vmatpush1.msra.mxu0 %v62
    %713 = vmatprep.subr.mxu0 0.0
    %714 = vmatpush1.msra.mxu0 %v63
    %715 = vmatprep.subr.mxu0 0.0
    %716 = vmatpush1.msra.mxu0 %v64
    %717 = vmatprep.subr.mxu0 0.0
    %718 = vmatpush1.msra.mxu0 %v65
    %719 = vmatprep.subr.mxu0 0.0
    %720 = vmatpush1.msra.mxu0 %v66
    %721 = vmatprep.subr.mxu0 0.0
    %722 = vmatpush1.msra.mxu0 %v67
    %723 = vmatprep.subr.mxu0 0.0
    %724 = vmatpush1.msra.mxu0 %v68
    %725 = vmatprep.subr.mxu0 0.0
    %726 = vmatpush1.msra.mxu0 %v69
    %727 = vmatprep.subr.mxu0 0.0
    %728 = vmatpush1.msra.mxu0 %v70
    %729 = vmatprep.subr.mxu0 0.0
    %730 = vmatpush1.msra.mxu0 %v71
    %731 = vmatprep.subr.mxu0 0.0
    %732 = vmatpush1.msra.mxu0 %v72
    %733 = vmatprep.subr.mxu0 0.0
    %734 = vmatpush1.msra.mxu0 %v73
    %735 = vmatprep.subr.mxu0 0.0
    %736 = vmatpush1.msra.mxu0 %v74
    %737 = vmatprep.subr.mxu0 0.0
    %738 = vmatpush1.msra.mxu0 %v75
    %739 = vmatprep.subr.mxu0 0.0
    %740 = vmatpush1.msra.mxu0 %v76
    %741 = vmatprep.subr.mxu0 0.0
    %742 = vmatpush1.msra.mxu0 %v77
    %743 = vmatprep.subr.mxu0 0.0
    %744 = vmatpush1.msra.mxu0 %v78
    %745 = vmatprep.subr.mxu0 0.0
    %746 = vmatpush1.msra.mxu0 %v79
    %747 = vmatprep.subr.mxu0 0.0
    %748 = vmatpush1.msra.mxu0 %v80
    %749 = vmatprep.subr.mxu0 0.0
    %750 = vmatpush1.msra.mxu0 %v81
    %751 = vmatprep.subr.mxu0 0.0
    %752 = vmatpush1.msra.mxu0 %v82
    %753 = vmatprep.subr.mxu0 0.0
    %754 = vmatpush1.msra.mxu0 %v83
    %755 = vmatprep.subr.mxu0 0.0
    %756 = vmatpush1.msra.mxu0 %v84
    %757 = vmatprep.subr.mxu0 0.0
    %758 = vmatpush1.msra.mxu0 %v85
    %759 = vmatprep.subr.mxu0 0.0
    %760 = vmatpush1.msra.mxu0 %v86
    %761 = vmatprep.subr.mxu0 0.0
    %762 = vmatpush1.msra.mxu0 %v87
    %763 = vmatprep.subr.mxu0 0.0
    %764 = vmatpush1.msra.mxu0 %v88
    %765 = vmatprep.subr.mxu0 0.0
    %766 = vmatpush1.msra.mxu0 %v89
    %767 = vmatprep.subr.mxu0 0.0
    %768 = vmatpush1.msra.mxu0 %v90
    %769 = vmatprep.subr.mxu0 0.0
    %770 = vmatpush1.msra.mxu0 %v91
    %771 = vmatprep.mubr.f32.mxu0 %v695
    %772 = vmatmul.mubr.f32.gmra.mrb[0].mxu0 %v525
    %v773 = vpop.f32.mrb[0].mxu0
    %v774 = vadd.f32 %v706, %v773
    %v775 = vpop.f32.mrb[0].mxu0
    %776 = vmatprep.mubr.f32.mxu0 %v700
    %777 = vmatmul.mubr.f32.gmra.mrb[0].mxu0 %v530
    %v778 = vpop.f32.mrb[0].mxu0
    %v779 = vadd.f32 %v706, %v778
    %v780 = vpop.f32.mrb[0].mxu0
    %781 = vdwg.mxu0
    %v782 = vadd.f32 %v774, %v21
    %v783 = vadd.f32 %v779, %v22
    %v784 = vsel %vm102, %v782, 0.0
    %785 = vadd.xlane.f32.xlu0 %v784
    %v786 = vpop.xlane.xlu0 %785
    %v787 = vsel %vm102, %v783, 0.0
    %788 = vadd.xlane.f32.xlu0 %v787
    %v789 = vpop.xlane.xlu0 %788
    %v790 = vrcp.pop 32.0
    %v791 = vmul.f32 %v786, %v790
    %v792 = vmul.f32 %v789, %v790
    %v793 = vsub.f32 %v782, %v791
    %v794 = vsub.f32 %v783, %v792
    %v795 = vmul.f32 %v793, %v793
    %v796 = vmul.f32 %v794, %v794
    %v797 = vsel %vm102, %v795, 0.0
    %798 = vadd.xlane.f32.xlu0 %v797
    %v799 = vpop.xlane.xlu0 %798
    %v800 = vsel %vm102, %v796, 0.0
    %801 = vadd.xlane.f32.xlu0 %v800
    %v802 = vpop.xlane.xlu0 %801
    %v803 = vmul.f32 %v799, %v790
    %v804 = vmul.f32 %v802, %v790
    %v805 = vadd.f32 %v803, 1e-12
    %v806 = vadd.f32 %v804, 1e-12
    %v807 = vrsqrt.pop %v805
    %v808 = vrsqrt.pop %v806
    %v809 = vmul.f32 %v793, %v807
    %v810 = vmul.f32 %v794, %v808
    %v811 = vlaneseq
    %v812 = vshrl.u32 %v811, 7
    %v813 = vsub.s32 1, %v812
    %v814 = vrot.slane %v101, %v813
    %v815 = vmul.f32 %v809, %v814
    %v816 = vmul.f32 %v810, %v814
    %v817 = vlaneseq
    %v818 = vshrl.u32 %v817, 7
    %v819 = vsub.s32 2, %v818
    %v820 = vrot.slane %v101, %v819
    %v821 = vadd.f32 %v815, %v820
    %v822 = vadd.f32 %v816, %v820
    %v823 = vsel %vm102, %v821, 1.0
    %v824 = vsel %vm102, %v822, 1.0
    %v826 = vsel %vm105, %v823, 0
    %v829 = vsel %vm105, %v824, 0
    %v832 = vsel %vm112, %v59, 0
    %834 = vmatprep.subr.mxu0 0.0
    %835 = vmatpush1.msra.mxu0 %v31
    %836 = vmatprep.subr.mxu0 0.0
    %837 = vmatpush1.msra.mxu0 %v38
    %838 = vmatprep.subr.mxu0 0.0
    %839 = vmatpush1.msra.mxu0 %v45
    %840 = vmatprep.subr.mxu0 0.0
    %841 = vmatpush1.msra.mxu0 %v52
    %842 = vmatprep.subr.mxu0 0.0
    %843 = vmatpush1.msra.mxu0 %v832
    %844 = vmatprep.subr.mxu0 0.0
    %845 = vmatpush1.msra.mxu0 0.0
    %846 = vmatprep.subr.mxu0 0.0
    %847 = vmatpush1.msra.mxu0 0.0
    %848 = vmatprep.subr.mxu0 0.0
    %849 = vmatpush1.msra.mxu0 0.0
    %850 = vmatprep.subr.mxu0 0.0
    %851 = vmatpush1.msra.mxu0 0.0
    %852 = vmatprep.subr.mxu0 0.0
    %853 = vmatpush1.msra.mxu0 0.0
    %854 = vmatprep.subr.mxu0 0.0
    %855 = vmatpush1.msra.mxu0 0.0
    %856 = vmatprep.subr.mxu0 0.0
    %857 = vmatpush1.msra.mxu0 0.0
    %858 = vmatprep.subr.mxu0 0.0
    %859 = vmatpush1.msra.mxu0 0.0
    %860 = vmatprep.subr.mxu0 0.0
    %861 = vmatpush1.msra.mxu0 0.0
    %862 = vmatprep.subr.mxu0 0.0
    %863 = vmatpush1.msra.mxu0 0.0
    %864 = vmatprep.subr.mxu0 0.0
    %865 = vmatpush1.msra.mxu0 0.0
    %866 = vmatprep.subr.mxu0 0.0
    %867 = vmatpush1.msra.mxu0 0.0
    %868 = vmatprep.subr.mxu0 0.0
    %869 = vmatpush1.msra.mxu0 0.0
    %870 = vmatprep.subr.mxu0 0.0
    %871 = vmatpush1.msra.mxu0 0.0
    %872 = vmatprep.subr.mxu0 0.0
    %873 = vmatpush1.msra.mxu0 0.0
    %874 = vmatprep.subr.mxu0 0.0
    %875 = vmatpush1.msra.mxu0 0.0
    %876 = vmatprep.subr.mxu0 0.0
    %877 = vmatpush1.msra.mxu0 0.0
    %878 = vmatprep.subr.mxu0 0.0
    %879 = vmatpush1.msra.mxu0 0.0
    %880 = vmatprep.subr.mxu0 0.0
    %881 = vmatpush1.msra.mxu0 0.0
    %882 = vmatprep.subr.mxu0 0.0
    %883 = vmatpush1.msra.mxu0 0.0
    %884 = vmatprep.subr.mxu0 0.0
    %885 = vmatpush1.msra.mxu0 0.0
    %886 = vmatprep.subr.mxu0 0.0
    %887 = vmatpush1.msra.mxu0 0.0
    %888 = vmatprep.subr.mxu0 0.0
    %889 = vmatpush1.msra.mxu0 0.0
    %890 = vmatprep.subr.mxu0 0.0
    %891 = vmatpush1.msra.mxu0 0.0
    %892 = vmatprep.subr.mxu0 0.0
    %893 = vmatpush1.msra.mxu0 0.0
    %894 = vmatprep.subr.mxu0 0.0
    %895 = vmatpush1.msra.mxu0 0.0
    %896 = vmatprep.subr.mxu0 0.0
    %897 = vmatpush1.msra.mxu0 0.0
    %898 = vmatprep.mubr.f32.mxu0 0.0
    %899 = vmatmul.mubr.f32.gmra.mrb[0].mxu0 %v826
    %v900 = vpop.f32.mrb[0].mxu0
    %v901 = vadd.f32 0.0, %v900
    %v902 = vpop.f32.mrb[0].mxu0
    %903 = vmatprep.mubr.f32.mxu0 0.0
    %904 = vmatmul.mubr.f32.gmra.mrb[0].mxu0 %v829
    %v905 = vpop.f32.mrb[0].mxu0
    %v906 = vadd.f32 0.0, %v905
    %v907 = vpop.f32.mrb[0].mxu0
    %908 = vdwg.mxu0
    %v909 = vmul.f32 %v901, 0.5
    %v910 = vmul.f32 %v906, 0.5
    %v911 = vmul.f32 %v901, 0.70710677
    %v912 = vmul.f32 %v906, 0.70710677
    %v913 = verf.f32.pop %v911
    %v914 = verf.f32.pop %v912
    %v915 = vadd.f32 %v913, 1.0
    %v916 = vadd.f32 %v914, 1.0
    %v917 = vmul.f32 %v909, %v915
    %v918 = vmul.f32 %v910, %v916
    %vm919 = vcmask 523264
    %v920 = vsel %vm919, %v917, 1.0
    %v921 = vsel %vm919, %v918, 1.0
    %vm922 = vcmask 531456
    %v924 = vsel %vm922, %v920, 0
    %v927 = vsel %vm922, %v921, 0
    %v930 = vsel %vm112, %v100, 0
    %932 = vmatprep.subr.mxu0 0.0
    %933 = vmatpush1.msra.mxu0 %v92
    %934 = vmatprep.subr.mxu0 0.0
    %935 = vmatpush1.msra.mxu0 %v93
    %936 = vmatprep.subr.mxu0 0.0
    %937 = vmatpush1.msra.mxu0 %v94
    %938 = vmatprep.subr.mxu0 0.0
    %939 = vmatpush1.msra.mxu0 %v95
    %940 = vmatprep.subr.mxu0 0.0
    %941 = vmatpush1.msra.mxu0 %v96
    %942 = vmatprep.subr.mxu0 0.0
    %943 = vmatpush1.msra.mxu0 %v97
    %944 = vmatprep.subr.mxu0 0.0
    %945 = vmatpush1.msra.mxu0 %v98
    %946 = vmatprep.subr.mxu0 0.0
    %947 = vmatpush1.msra.mxu0 %v99
    %948 = vmatprep.subr.mxu0 0.0
    %949 = vmatpush1.msra.mxu0 %v930
    %950 = vmatprep.subr.mxu0 0.0
    %951 = vmatpush1.msra.mxu0 0.0
    %952 = vmatprep.subr.mxu0 0.0
    %953 = vmatpush1.msra.mxu0 0.0
    %954 = vmatprep.subr.mxu0 0.0
    %955 = vmatpush1.msra.mxu0 0.0
    %956 = vmatprep.subr.mxu0 0.0
    %957 = vmatpush1.msra.mxu0 0.0
    %958 = vmatprep.subr.mxu0 0.0
    %959 = vmatpush1.msra.mxu0 0.0
    %960 = vmatprep.subr.mxu0 0.0
    %961 = vmatpush1.msra.mxu0 0.0
    %962 = vmatprep.subr.mxu0 0.0
    %963 = vmatpush1.msra.mxu0 0.0
    %964 = vmatprep.subr.mxu0 0.0
    %965 = vmatpush1.msra.mxu0 0.0
    %966 = vmatprep.subr.mxu0 0.0
    %967 = vmatpush1.msra.mxu0 0.0
    %968 = vmatprep.subr.mxu0 0.0
    %969 = vmatpush1.msra.mxu0 0.0
    %970 = vmatprep.subr.mxu0 0.0
    %971 = vmatpush1.msra.mxu0 0.0
    %972 = vmatprep.subr.mxu0 0.0
    %973 = vmatpush1.msra.mxu0 0.0
    %974 = vmatprep.subr.mxu0 0.0
    %975 = vmatpush1.msra.mxu0 0.0
    %976 = vmatprep.subr.mxu0 0.0
    %977 = vmatpush1.msra.mxu0 0.0
    %978 = vmatprep.subr.mxu0 0.0
    %979 = vmatpush1.msra.mxu0 0.0
    %980 = vmatprep.subr.mxu0 0.0
    %981 = vmatpush1.msra.mxu0 0.0
    %982 = vmatprep.subr.mxu0 0.0
    %983 = vmatpush1.msra.mxu0 0.0
    %984 = vmatprep.subr.mxu0 0.0
    %985 = vmatpush1.msra.mxu0 0.0
    %986 = vmatprep.subr.mxu0 0.0
    %987 = vmatpush1.msra.mxu0 0.0
    %988 = vmatprep.subr.mxu0 0.0
    %989 = vmatpush1.msra.mxu0 0.0
    %990 = vmatprep.subr.mxu0 0.0
    %991 = vmatpush1.msra.mxu0 0.0
    %992 = vmatprep.subr.mxu0 0.0
    %993 = vmatpush1.msra.mxu0 0.0
    %994 = vmatprep.subr.mxu0 0.0
    %995 = vmatpush1.msra.mxu0 0.0
    %996 = vmatprep.mubr.f32.mxu0 0.0
    %997 = vmatmul.mubr.f32.gmra.mrb[0].mxu0 %v924
    %v998 = vpop.f32.mrb[0].mxu0
    %v999 = vadd.f32 %v821, %v998
    %v1000 = vpop.f32.mrb[0].mxu0
    %1001 = vmatprep.mubr.f32.mxu0 0.0
    %1002 = vmatmul.mubr.f32.gmra.mrb[0].mxu0 %v927
    %v1003 = vpop.f32.mrb[0].mxu0
    %v1004 = vadd.f32 %v822, %v1003
    %v1005 = vpop.f32.mrb[0].mxu0
    %1006 = vdwg.mxu0
    %v1007 = vsel %vm102, %v999, 0.0
    %1008 = vadd.xlane.f32.xlu0 %v1007
    %v1009 = vpop.xlane.xlu0 %1008
    %v1010 = vsel %vm102, %v1004, 0.0
    %1011 = vadd.xlane.f32.xlu0 %v1010
    %v1012 = vpop.xlane.xlu0 %1011
    %v1013 = vmul.f32 %v1009, %v790
    %v1014 = vmul.f32 %v1012, %v790
    %v1015 = vsub.f32 %v999, %v1013
    %v1016 = vsub.f32 %v1004, %v1014
    %v1017 = vmul.f32 %v1015, %v1015
    %v1018 = vmul.f32 %v1016, %v1016
    %v1019 = vsel %vm102, %v1017, 0.0
    %1020 = vadd.xlane.f32.xlu0 %v1019
    %v1021 = vpop.xlane.xlu0 %1020
    %v1022 = vsel %vm102, %v1018, 0.0
    %1023 = vadd.xlane.f32.xlu0 %v1022
    %v1024 = vpop.xlane.xlu0 %1023
    %v1025 = vmul.f32 %v1021, %v790
    %v1026 = vmul.f32 %v1024, %v790
    %v1027 = vadd.f32 %v1025, 1e-12
    %v1028 = vadd.f32 %v1026, 1e-12
    %v1029 = vrsqrt.pop %v1027
    %v1030 = vrsqrt.pop %v1028
    %v1031 = vmul.f32 %v1015, %v1029
    %v1032 = vmul.f32 %v1016, %v1030
    %v1033 = vlaneseq
    %v1034 = vshrl.u32 %v1033, 7
    %v1035 = vsub.s32 3, %v1034
    %v1036 = vrot.slane %v101, %v1035
    %v1037 = vmul.f32 %v1031, %v1036
    %v1038 = vmul.f32 %v1032, %v1036
    %v1039 = vlaneseq
    %v1040 = vshrl.u32 %v1039, 7
    %v1041 = vsub.s32 4, %v1040
    %v1042 = vrot.slane %v101, %v1041
    %v1043 = vadd.f32 %v1037, %v1042
    %v1044 = vadd.f32 %v1038, %v1042
    %1045 = vst.msk [vmem:[#allocation2] sm:$0xff] %vm102, %v1043
    %1046 = vst.msk [vmem:[#allocation2 + $0x8] sm:$0xff] %vm102, %v1044
    // Predicated region
    $region22: #{tpu_custom_call.1} parent=1 // pred_check
      _
    $region23: #{tpu_custom_call.1} parent=1 // pred_check_branch
      %1048 = sbr.rel (0) target = $region25
    $region24: #{tpu_custom_call.1} parent=1 // pred_region
      %s1050 = ssub.s32 256, 256
      %1051 = vsyncadd [#allocation3], %s1050
      %s1052 = sshll.u32 [#allocation2], 4
      %s1053 = int_to_ptr.vmem [resolvable:$true] %s1052
      %1058 = dma.vmem_to_hbm [thread:$0]  %s1053, 256, %s5, [#allocation3], 128, 128, 8
    $region25: #{tpu_custom_call.1} parent=1 // pred_fallthru
      _
    // Predicated region
    $region26: #{tpu_custom_call.1} parent=1 // pred_check
      _
    $region27: #{tpu_custom_call.1} parent=1 // pred_check_branch
      %1060 = sbr.rel (0) target = $region29
    $region28: #{tpu_custom_call.1} parent=1 // pred_region
      %1061 = dma.done [#allocation3], 256
    $region29: #{tpu_custom_call.1} parent=1 // pred_fallthru
      _
    %1062 = vsyncpa [#allocation3], 1

</llo_original>
